<compile_context>
chip_gen: v5e
topology: v5e:2x2
jax: 0.10.0
libtpu: 0.0.40
codegen_flags: <defaults>
</compile_context>

<pallas_src>
import jax
import jax.numpy as jnp
from jax import lax
from jax.experimental import pallas as pl
from jax.experimental.pallas import tpu as pltpu


def _conv1x1_mask_kernel(lens_ref,              # scalar prefetch (SMEM): (B,) int32
                         x_ref, w_ref, b_ref,   # inputs (VMEM)
                         y_ref):                # output (VMEM)
    """One (T-tile, batch) block: y = where(t < lens[b], W @ x + b, 0)."""
    b = pl.program_id(1)
    t_tile = x_ref.shape[-1]
    t0 = pl.program_id(0) * t_tile
    length = lens_ref[b]

    x = x_ref[0].astype(jnp.float32)            # (C_in, t_tile)
    w = w_ref[...].astype(jnp.float32)          # (C_out, C_in)
    bias = b_ref[...].astype(jnp.float32)       # (C_out, 1)

    c_in = x.shape[0]
    if c_in >= 64:
        # Wide contraction: worth feeding the MXU.
        y = jnp.dot(w, x, preferred_element_type=jnp.float32)
    else:
        # Tiny contraction (4-8 channels): unrolled VPU broadcast-FMA avoids
        # MXU push/pop latency and padding the contraction dim to 128/256.
        y = w[:, 0:1] * x[0:1, :]
        for c in range(1, c_in):
            y = y + w[:, c:c + 1] * x[c:c + 1, :]

    y = y + bias
    t_idx = t0 + lax.broadcasted_iota(jnp.int32, (1, t_tile), 1)
    y = jnp.where(t_idx < length, y, 0.0)       # zeros both mask tail and T-pad
    y_ref[0] = y.astype(y_ref.dtype)


def _conv1x1_mask(x_nct, lengths, w, b, *, t_tile=512):
    """1x1 Conv1d + sequence mask, NCT layout, time axis tiled lane-dense.

    x_nct: (B, C_in, T); lengths: (B,) ints; w: (C_out, C_in); b: (C_out, 1).
    Returns y of shape (B, C_out, T).

    t_tile defaults to 512 (multiple of 128).  At hidden=512 f32 the
    double-buffered in+out tiles stay well under the 32 MiB default scoped
    VMEM, which also fits v7x's 64 MiB physical VMEM; sweep 512-2048 on
    v5e/v6e (raise vmem_limit_bytes if going above ~1024 at f32).
    """
    B, C_in, T = x_nct.shape
    C_out = w.shape[0]
    out_dtype = x_nct.dtype

    # Lane-dense tile: multiple of 128, no larger than the (128-rounded) T.
    t_tile = max(128, min(int(t_tile), ((T + 127) // 128) * 128))
    T_pad = ((T + t_tile - 1) // t_tile) * t_tile
    if T_pad != T:
        x_nct = jnp.pad(x_nct, ((0, 0), (0, 0), (0, T_pad - T)))
    n_t = T_pad // t_tile

    grid_spec = pltpu.PrefetchScalarGridSpec(
        num_scalar_prefetch=1,
        # T-tiles leading so megacore (v7x) has a fine-grained parallel axis
        # even when B is 1-2; weight/bias index_map is constant -> resident.
        grid=(n_t, B),
        in_specs=[
            pl.BlockSpec((1, C_in, t_tile), lambda t, i, lens: (i, 0, t)),
            pl.BlockSpec((C_out, C_in), lambda t, i, lens: (0, 0)),
            pl.BlockSpec((C_out, 1), lambda t, i, lens: (0, 0)),
        ],
        out_specs=pl.BlockSpec((1, C_out, t_tile), lambda t, i, lens: (i, 0, t)),
    )

    y = pl.pallas_call(
        _conv1x1_mask_kernel,
        grid_spec=grid_spec,
        out_shape=jax.ShapeDtypeStruct((B, C_out, T_pad), out_dtype),
        compiler_params=pltpu.CompilerParams(
            dimension_semantics=("parallel", "parallel")),
    )(lengths.astype(jnp.int32), x_nct, w, b)

    if T_pad != T:
        y = y[:, :, :T]
    return y


@jax.jit
def duration_predictor_forward(x, x_lengths, prompt, prompt_lengths,
                               w_pre, b_pre, w_prompt, b_prompt):
    """Pallas implementation of DurationPredictor.forward up to the UNet call.

    x: (B, in_channels, T);  prompt: (B, prompt_channels, T_p).
    Returns (x_hidden, x_mask, prompt_hidden, prompt_mask):
      x_hidden      = pre(x) * x_mask                 (B, hidden, T)
      prompt_hidden = prompt_proj(prompt) * p_mask    (B, hidden, T_p)
      x_mask, prompt_mask: (B, 1, T) / (B, 1, T_p)
    """
    dt = x.dtype
    T = x.shape[2]
    T_p = prompt.shape[2]

    # Masks are a trivial iota+compare; computing them in the kernel was one
    # extra partial-store DMA stream per grid step, so they live in plain JAX.
    x_mask = (jnp.arange(T)[None, :] < x_lengths[:, None]
              ).astype(dt)[:, None, :]
    prompt_mask = (jnp.arange(T_p)[None, :] < prompt_lengths[:, None]
                   ).astype(dt)[:, None, :]

    x_hidden = _conv1x1_mask(x, x_lengths, w_pre, b_pre)
    prompt_hidden = _conv1x1_mask(prompt, prompt_lengths, w_prompt, b_prompt)

    # TODO(synk): x = self.enc(x_hidden, 1, prompt_hidden.transpose(1, 2),
    #             encoder_attention_mask=prompt_mask).sample * x_mask
    #             (diffusers UNet1DConditionModel) is not translated.
    return x_hidden, x_mask, prompt_hidden, prompt_mask


if __name__ == "__main__":
    # Small, module-consistent shapes.
    B, C_in, H, C_prompt, T, T_p = 2, 4, 32, 8, 16, 16

    key = jax.random.PRNGKey(0)
    kx, kp, kw1, kb1, kw2, kb2 = jax.random.split(key, 6)

    x = jax.random.normal(kx, (B, C_in, T), dtype=jnp.float32)
    prompt = jax.random.normal(kp, (B, C_prompt, T_p), dtype=jnp.float32)
    x_lengths = jnp.array([T, 10], dtype=jnp.int32)
    prompt_lengths = jnp.array([T_p, 7], dtype=jnp.int32)

    # Conv1d(in, hidden, 1)  -> weight (hidden, in), bias (hidden, 1)
    w_pre = jax.random.normal(kw1, (H, C_in), dtype=jnp.float32) * 0.1
    b_pre = jax.random.normal(kb1, (H, 1), dtype=jnp.float32) * 0.01
    # Conv1d(prompt_channels, hidden, 1)
    w_prompt = jax.random.normal(kw2, (H, C_prompt), dtype=jnp.float32) * 0.1
    b_prompt = jax.random.normal(kb2, (H, 1), dtype=jnp.float32) * 0.01

    x_hidden, x_mask, prompt_hidden, prompt_mask = duration_predictor_forward(
        x, x_lengths, prompt, prompt_lengths, w_pre, b_pre, w_prompt, b_prompt)
    jax.block_until_ready((x_hidden, x_mask, prompt_hidden, prompt_mask))

    assert x_hidden.shape == (B, H, T)
    assert x_mask.shape == (B, 1, T)
    assert prompt_hidden.shape == (B, H, T_p)
    assert prompt_mask.shape == (B, 1, T_p)

    # Pure-JAX reference check.
    x_mask_ref = (jnp.arange(T)[None, :] < x_lengths[:, None]
                  ).astype(jnp.float32)[:, None, :]
    p_mask_ref = (jnp.arange(T_p)[None, :] < prompt_lengths[:, None]
                  ).astype(jnp.float32)[:, None, :]
    x_hidden_ref = (jnp.einsum("hc,bct->bht", w_pre, x) + b_pre[None]) * x_mask_ref
    p_hidden_ref = (jnp.einsum("hc,bct->bht", w_prompt, prompt)
                    + b_prompt[None]) * p_mask_ref

    assert jnp.allclose(x_mask, x_mask_ref)
    assert jnp.allclose(prompt_mask, p_mask_ref)
    assert jnp.allclose(x_hidden, x_hidden_ref, atol=1e-5)
    assert jnp.allclose(prompt_hidden, p_hidden_ref, atol=1e-5)

    print("KERNEL_OK")
</pallas_src>

<mosaic_0001>
module attributes {stable_mosaic.version = 11 : i64} {
  func.func @_conv1x1_mask_kernel(%arg0: i32, %arg1: i32, %arg2: memref<2xi32, #tpu.memory_space<smem>>, %arg3: memref<1x8x128xf32, #tpu.memory_space<vmem>>, %arg4: memref<32x8xf32, #tpu.memory_space<vmem>>, %arg5: memref<32x1xf32, #tpu.memory_space<vmem>>, %arg6: memref<1x32x128xf32, #tpu.memory_space<vmem>>) attributes {dimension_semantics = [#tpu.dimension_semantics<parallel>, #tpu.dimension_semantics<parallel>], iteration_bounds = array<i64: 1, 2>, scalar_prefetch = 1 : i64, scratch_operands = 0 : i64, tpu.core_type = #tpu.core_type<tc>, window_params = [{transform_indices = @transform_0, window_bounds = array<i64: 1, 8, 128>}, {pipeline_mode = #tpu.pipeline_mode<synchronous>, transform_indices = @transform_1, window_bounds = array<i64: 32, 8>}, {pipeline_mode = #tpu.pipeline_mode<synchronous>, transform_indices = @transform_2, window_bounds = array<i64: 32, 1>}, {transform_indices = @transform_3, window_bounds = array<i64: 1, 32, 128>}]} {
    %c128_i32 = arith.constant 128 : i32
    %0 = arith.muli %arg0, %c128_i32 : i32
    %1 = arith.index_cast %arg1 : i32 to index
    %2 = memref.load %arg2[%1] : memref<2xi32, #tpu.memory_space<smem>>
    %c0 = arith.constant 0 : index
    %c0_0 = arith.constant 0 : index
    %c0_1 = arith.constant 0 : index
    %3 = vector.load %arg3[%c0, %c0_0, %c0_1] : memref<1x8x128xf32, #tpu.memory_space<vmem>>, vector<1x8x128xf32>
    %4 = vector.shape_cast %3 : vector<1x8x128xf32> to vector<8x128xf32>
    %c0_2 = arith.constant 0 : index
    %c0_3 = arith.constant 0 : index
    %5 = vector.load %arg4[%c0_2, %c0_3] : memref<32x8xf32, #tpu.memory_space<vmem>>, vector<32x8xf32>
    %c0_4 = arith.constant 0 : index
    %c0_5 = arith.constant 0 : index
    %6 = vector.load %arg5[%c0_4, %c0_5] : memref<32x1xf32, #tpu.memory_space<vmem>>, vector<32x1xf32>
    %7 = vector.extract_strided_slice %5 {offsets = [0, 0], sizes = [32, 1], strides = [1, 1]} : vector<32x8xf32> to vector<32x1xf32>
    %8 = vector.extract_strided_slice %4 {offsets = [0, 0], sizes = [1, 128], strides = [1, 1]} : vector<8x128xf32> to vector<1x128xf32>
    %9 = vector.broadcast %7 : vector<32x1xf32> to vector<32x128xf32>
    %10 = vector.broadcast %8 : vector<1x128xf32> to vector<32x128xf32>
    %11 = arith.mulf %9, %10 : vector<32x128xf32>
    %12 = vector.extract_strided_slice %5 {offsets = [0, 1], sizes = [32, 1], strides = [1, 1]} : vector<32x8xf32> to vector<32x1xf32>
    %13 = vector.extract_strided_slice %4 {offsets = [1, 0], sizes = [1, 128], strides = [1, 1]} : vector<8x128xf32> to vector<1x128xf32>
    %14 = vector.broadcast %12 : vector<32x1xf32> to vector<32x128xf32>
    %15 = vector.broadcast %13 : vector<1x128xf32> to vector<32x128xf32>
    %16 = arith.mulf %14, %15 : vector<32x128xf32>
    %17 = arith.addf %11, %16 : vector<32x128xf32>
    %18 = vector.extract_strided_slice %5 {offsets = [0, 2], sizes = [32, 1], strides = [1, 1]} : vector<32x8xf32> to vector<32x1xf32>
    %19 = vector.extract_strided_slice %4 {offsets = [2, 0], sizes = [1, 128], strides = [1, 1]} : vector<8x128xf32> to vector<1x128xf32>
    %20 = vector.broadcast %18 : vector<32x1xf32> to vector<32x128xf32>
    %21 = vector.broadcast %19 : vector<1x128xf32> to vector<32x128xf32>
    %22 = arith.mulf %20, %21 : vector<32x128xf32>
    %23 = arith.addf %17, %22 : vector<32x128xf32>
    %24 = vector.extract_strided_slice %5 {offsets = [0, 3], sizes = [32, 1], strides = [1, 1]} : vector<32x8xf32> to vector<32x1xf32>
    %25 = vector.extract_strided_slice %4 {offsets = [3, 0], sizes = [1, 128], strides = [1, 1]} : vector<8x128xf32> to vector<1x128xf32>
    %26 = vector.broadcast %24 : vector<32x1xf32> to vector<32x128xf32>
    %27 = vector.broadcast %25 : vector<1x128xf32> to vector<32x128xf32>
    %28 = arith.mulf %26, %27 : vector<32x128xf32>
    %29 = arith.addf %23, %28 : vector<32x128xf32>
    %30 = vector.extract_strided_slice %5 {offsets = [0, 4], sizes = [32, 1], strides = [1, 1]} : vector<32x8xf32> to vector<32x1xf32>
    %31 = vector.extract_strided_slice %4 {offsets = [4, 0], sizes = [1, 128], strides = [1, 1]} : vector<8x128xf32> to vector<1x128xf32>
    %32 = vector.broadcast %30 : vector<32x1xf32> to vector<32x128xf32>
    %33 = vector.broadcast %31 : vector<1x128xf32> to vector<32x128xf32>
    %34 = arith.mulf %32, %33 : vector<32x128xf32>
    %35 = arith.addf %29, %34 : vector<32x128xf32>
    %36 = vector.extract_strided_slice %5 {offsets = [0, 5], sizes = [32, 1], strides = [1, 1]} : vector<32x8xf32> to vector<32x1xf32>
    %37 = vector.extract_strided_slice %4 {offsets = [5, 0], sizes = [1, 128], strides = [1, 1]} : vector<8x128xf32> to vector<1x128xf32>
    %38 = vector.broadcast %36 : vector<32x1xf32> to vector<32x128xf32>
    %39 = vector.broadcast %37 : vector<1x128xf32> to vector<32x128xf32>
    %40 = arith.mulf %38, %39 : vector<32x128xf32>
    %41 = arith.addf %35, %40 : vector<32x128xf32>
    %42 = vector.extract_strided_slice %5 {offsets = [0, 6], sizes = [32, 1], strides = [1, 1]} : vector<32x8xf32> to vector<32x1xf32>
    %43 = vector.extract_strided_slice %4 {offsets = [6, 0], sizes = [1, 128], strides = [1, 1]} : vector<8x128xf32> to vector<1x128xf32>
    %44 = vector.broadcast %42 : vector<32x1xf32> to vector<32x128xf32>
    %45 = vector.broadcast %43 : vector<1x128xf32> to vector<32x128xf32>
    %46 = arith.mulf %44, %45 : vector<32x128xf32>
    %47 = arith.addf %41, %46 : vector<32x128xf32>
    %48 = vector.extract_strided_slice %5 {offsets = [0, 7], sizes = [32, 1], strides = [1, 1]} : vector<32x8xf32> to vector<32x1xf32>
    %49 = vector.extract_strided_slice %4 {offsets = [7, 0], sizes = [1, 128], strides = [1, 1]} : vector<8x128xf32> to vector<1x128xf32>
    %50 = vector.broadcast %48 : vector<32x1xf32> to vector<32x128xf32>
    %51 = vector.broadcast %49 : vector<1x128xf32> to vector<32x128xf32>
    %52 = arith.mulf %50, %51 : vector<32x128xf32>
    %53 = arith.addf %47, %52 : vector<32x128xf32>
    %54 = vector.broadcast %6 : vector<32x1xf32> to vector<32x128xf32>
    %55 = arith.addf %53, %54 : vector<32x128xf32>
    %56 = tpu.iota {dimensions = array<i32: 1>} : vector<1x128xi32>
    %57 = vector.broadcast %0 : i32 to vector<1x128xi32>
    %58 = arith.addi %57, %56 : vector<1x128xi32>
    %59 = vector.broadcast %2 : i32 to vector<1x128xi32>
    %60 = arith.cmpi slt, %58, %59 : vector<1x128xi32>
    %cst = arith.constant 0.000000e+00 : f32
    %61 = vector.shape_cast %60 : vector<1x128xi1> to vector<1x128xi1>
    %62 = vector.broadcast %61 : vector<1x128xi1> to vector<32x128xi1>
    %63 = vector.broadcast %cst : f32 to vector<32x128xf32>
    %64 = arith.select %62, %55, %63 : vector<32x128xi1>, vector<32x128xf32>
    %c0_6 = arith.constant 0 : index
    %c0_7 = arith.constant 0 : index
    %c0_8 = arith.constant 0 : index
    %65 = vector.load %arg6[%c0_6, %c0_7, %c0_8] : memref<1x32x128xf32, #tpu.memory_space<vmem>>, vector<1x32x128xf32>
    %66 = vector.shape_cast %65 : vector<1x32x128xf32> to vector<32x128xf32>
    %67 = vector.shape_cast %64 : vector<32x128xf32> to vector<1x32x128xf32>
    tpu.vector_store %arg6[%c0_6, %c0_7, %c0_8], %67 {strides = array<i32>} : memref<1x32x128xf32, #tpu.memory_space<vmem>>, vector<1x32x128xf32>,
    return
  }
  func.func @transform_0(%arg0: i32, %arg1: i32, %arg2: memref<2xi32, #tpu.memory_space<smem>>) -> (i32, i32, i32) {
    %c0_i32 = arith.constant 0 : i32
    %c0_i32_0 = arith.constant 0 : i32
    return %arg1, %c0_i32, %arg0 : i32, i32, i32
  }
  func.func @transform_1(%arg0: i32, %arg1: i32, %arg2: memref<2xi32, #tpu.memory_space<smem>>) -> (i32, i32) {
    %c0_i32 = arith.constant 0 : i32
    %c0_i32_0 = arith.constant 0 : i32
    %c0_i32_1 = arith.constant 0 : i32
    return %c0_i32, %c0_i32_0 : i32, i32
  }
  func.func @transform_2(%arg0: i32, %arg1: i32, %arg2: memref<2xi32, #tpu.memory_space<smem>>) -> (i32, i32) {
    %c0_i32 = arith.constant 0 : i32
    %c0_i32_0 = arith.constant 0 : i32
    %c0_i32_1 = arith.constant 0 : i32
    return %c0_i32, %c0_i32_0 : i32, i32
  }
  func.func @transform_3(%arg0: i32, %arg1: i32, %arg2: memref<2xi32, #tpu.memory_space<smem>>) -> (i32, i32, i32) {
    %c0_i32 = arith.constant 0 : i32
    %c0_i32_0 = arith.constant 0 : i32
    return %arg1, %c0_i32, %arg0 : i32, i32, i32
  }
}

module attributes {stable_mosaic.version = 11 : i64} {
  func.func @_conv1x1_mask_kernel(%arg0: i32, %arg1: i32, %arg2: memref<2xi32, #tpu.memory_space<smem>>, %arg3: memref<1x4x128xf32, #tpu.memory_space<vmem>>, %arg4: memref<32x4xf32, #tpu.memory_space<vmem>>, %arg5: memref<32x1xf32, #tpu.memory_space<vmem>>, %arg6: memref<1x32x128xf32, #tpu.memory_space<vmem>>) attributes {dimension_semantics = [#tpu.dimension_semantics<parallel>, #tpu.dimension_semantics<parallel>], iteration_bounds = array<i64: 1, 2>, scalar_prefetch = 1 : i64, scratch_operands = 0 : i64, tpu.core_type = #tpu.core_type<tc>, window_params = [{transform_indices = @transform_0, window_bounds = array<i64: 1, 4, 128>}, {pipeline_mode = #tpu.pipeline_mode<synchronous>, transform_indices = @transform_1, window_bounds = array<i64: 32, 4>}, {pipeline_mode = #tpu.pipeline_mode<synchronous>, transform_indices = @transform_2, window_bounds = array<i64: 32, 1>}, {transform_indices = @transform_3, window_bounds = array<i64: 1, 32, 128>}]} {
    %c128_i32 = arith.constant 128 : i32
    %0 = arith.muli %arg0, %c128_i32 : i32
    %1 = arith.index_cast %arg1 : i32 to index
    %2 = memref.load %arg2[%1] : memref<2xi32, #tpu.memory_space<smem>>
    %c0 = arith.constant 0 : index
    %c0_0 = arith.constant 0 : index
    %c0_1 = arith.constant 0 : index
    %3 = vector.load %arg3[%c0, %c0_0, %c0_1] : memref<1x4x128xf32, #tpu.memory_space<vmem>>, vector<1x4x128xf32>
    %4 = vector.shape_cast %3 : vector<1x4x128xf32> to vector<4x128xf32>
    %c0_2 = arith.constant 0 : index
    %c0_3 = arith.constant 0 : index
    %5 = vector.load %arg4[%c0_2, %c0_3] : memref<32x4xf32, #tpu.memory_space<vmem>>, vector<32x4xf32>
    %c0_4 = arith.constant 0 : index
    %c0_5 = arith.constant 0 : index
    %6 = vector.load %arg5[%c0_4, %c0_5] : memref<32x1xf32, #tpu.memory_space<vmem>>, vector<32x1xf32>
    %7 = vector.extract_strided_slice %5 {offsets = [0, 0], sizes = [32, 1], strides = [1, 1]} : vector<32x4xf32> to vector<32x1xf32>
    %8 = vector.extract_strided_slice %4 {offsets = [0, 0], sizes = [1, 128], strides = [1, 1]} : vector<4x128xf32> to vector<1x128xf32>
    %9 = vector.broadcast %7 : vector<32x1xf32> to vector<32x128xf32>
    %10 = vector.broadcast %8 : vector<1x128xf32> to vector<32x128xf32>
    %11 = arith.mulf %9, %10 : vector<32x128xf32>
    %12 = vector.extract_strided_slice %5 {offsets = [0, 1], sizes = [32, 1], strides = [1, 1]} : vector<32x4xf32> to vector<32x1xf32>
    %13 = vector.extract_strided_slice %4 {offsets = [1, 0], sizes = [1, 128], strides = [1, 1]} : vector<4x128xf32> to vector<1x128xf32>
    %14 = vector.broadcast %12 : vector<32x1xf32> to vector<32x128xf32>
    %15 = vector.broadcast %13 : vector<1x128xf32> to vector<32x128xf32>
    %16 = arith.mulf %14, %15 : vector<32x128xf32>
    %17 = arith.addf %11, %16 : vector<32x128xf32>
    %18 = vector.extract_strided_slice %5 {offsets = [0, 2], sizes = [32, 1], strides = [1, 1]} : vector<32x4xf32> to vector<32x1xf32>
    %19 = vector.extract_strided_slice %4 {offsets = [2, 0], sizes = [1, 128], strides = [1, 1]} : vector<4x128xf32> to vector<1x128xf32>
    %20 = vector.broadcast %18 : vector<32x1xf32> to vector<32x128xf32>
    %21 = vector.broadcast %19 : vector<1x128xf32> to vector<32x128xf32>
    %22 = arith.mulf %20, %21 : vector<32x128xf32>
    %23 = arith.addf %17, %22 : vector<32x128xf32>
    %24 = vector.extract_strided_slice %5 {offsets = [0, 3], sizes = [32, 1], strides = [1, 1]} : vector<32x4xf32> to vector<32x1xf32>
    %25 = vector.extract_strided_slice %4 {offsets = [3, 0], sizes = [1, 128], strides = [1, 1]} : vector<4x128xf32> to vector<1x128xf32>
    %26 = vector.broadcast %24 : vector<32x1xf32> to vector<32x128xf32>
    %27 = vector.broadcast %25 : vector<1x128xf32> to vector<32x128xf32>
    %28 = arith.mulf %26, %27 : vector<32x128xf32>
    %29 = arith.addf %23, %28 : vector<32x128xf32>
    %30 = vector.broadcast %6 : vector<32x1xf32> to vector<32x128xf32>
    %31 = arith.addf %29, %30 : vector<32x128xf32>
    %32 = tpu.iota {dimensions = array<i32: 1>} : vector<1x128xi32>
    %33 = vector.broadcast %0 : i32 to vector<1x128xi32>
    %34 = arith.addi %33, %32 : vector<1x128xi32>
    %35 = vector.broadcast %2 : i32 to vector<1x128xi32>
    %36 = arith.cmpi slt, %34, %35 : vector<1x128xi32>
    %cst = arith.constant 0.000000e+00 : f32
    %37 = vector.shape_cast %36 : vector<1x128xi1> to vector<1x128xi1>
    %38 = vector.broadcast %37 : vector<1x128xi1> to vector<32x128xi1>
    %39 = vector.broadcast %cst : f32 to vector<32x128xf32>
    %40 = arith.select %38, %31, %39 : vector<32x128xi1>, vector<32x128xf32>
    %c0_6 = arith.constant 0 : index
    %c0_7 = arith.constant 0 : index
    %c0_8 = arith.constant 0 : index
    %41 = vector.load %arg6[%c0_6, %c0_7, %c0_8] : memref<1x32x128xf32, #tpu.memory_space<vmem>>, vector<1x32x128xf32>
    %42 = vector.shape_cast %41 : vector<1x32x128xf32> to vector<32x128xf32>
    %43 = vector.shape_cast %40 : vector<32x128xf32> to vector<1x32x128xf32>
    tpu.vector_store %arg6[%c0_6, %c0_7, %c0_8], %43 {strides = array<i32>} : memref<1x32x128xf32, #tpu.memory_space<vmem>>, vector<1x32x128xf32>,
    return
  }
  func.func @transform_0(%arg0: i32, %arg1: i32, %arg2: memref<2xi32, #tpu.memory_space<smem>>) -> (i32, i32, i32) {
    %c0_i32 = arith.constant 0 : i32
    %c0_i32_0 = arith.constant 0 : i32
    return %arg1, %c0_i32, %arg0 : i32, i32, i32
  }
  func.func @transform_1(%arg0: i32, %arg1: i32, %arg2: memref<2xi32, #tpu.memory_space<smem>>) -> (i32, i32) {
    %c0_i32 = arith.constant 0 : i32
    %c0_i32_0 = arith.constant 0 : i32
    %c0_i32_1 = arith.constant 0 : i32
    return %c0_i32, %c0_i32_0 : i32, i32
  }
  func.func @transform_2(%arg0: i32, %arg1: i32, %arg2: memref<2xi32, #tpu.memory_space<smem>>) -> (i32, i32) {
    %c0_i32 = arith.constant 0 : i32
    %c0_i32_0 = arith.constant 0 : i32
    %c0_i32_1 = arith.constant 0 : i32
    return %c0_i32, %c0_i32_0 : i32, i32
  }
  func.func @transform_3(%arg0: i32, %arg1: i32, %arg2: memref<2xi32, #tpu.memory_space<smem>>) -> (i32, i32, i32) {
    %c0_i32 = arith.constant 0 : i32
    %c0_i32_0 = arith.constant 0 : i32
    return %arg1, %c0_i32, %arg0 : i32, i32, i32
  }
}

</mosaic_0001>

<llo_original>
// kernel: duration_predictor_forward.2
$region0: #{duration_predictor_forward.2}
  #allocation0 [shape = 'u32[]', space=smem, size = 0x4, offset = 0x4, fixed_abs, tag = 'smem constant byte address 0x4 - core index']
  #allocation1 [shape = 'u32[72,128]{1,0:T(1,128)}', space=vmem, size = 0x9000, scoped, tag = 'internal scratch']
  #allocation2 [shape = 's32[1]{0}', space=sflag, size = 0x4, scoped, tag = 'scoped memory for duration_predictor_forward.2']
  #allocation3 [shape = 'u8[512]{0}', space=smem, size = 0x200, scoped, tag = 'prefetched SMEM operand 0']
  %s0 = inlined_call_operand.vmem [shape: s32[2], index: 0, kind: input, shape index: {}]
  %s1 = inlined_call_operand.vmem [shape: f32[2,4,128], index: 1, kind: input, shape index: {}]
  %s2 = inlined_call_operand.vmem [shape: f32[32,4], index: 2, kind: input, shape index: {}]
  %s3 = inlined_call_operand.vmem [shape: f32[32,1], index: 3, kind: input, shape index: {}]
  %s4 = inlined_call_operand.vmem [shape: f32[2,32,128], index: 4, kind: output, shape index: {}]
  %s5 = sld [smem:[#allocation0]]
  $region45: #{duration_predictor_forward.2} parent=0
    _
  %s7 = ssub.s32 1, %s5
  %s8 = scalar_select 0, %s7, %s5
  %s10 = sshll.u32 %s0, 4
  %s11 = int_to_ptr.vmem [resolvable:$true] %s10
  %13 = dma.vmem_to_smem %s11, 16, [#allocation3], [#allocation2]
  %15 = dma.done [#allocation2], 16
  %16 = sfence
  loop: start=0, step=1, limit=4
  $region2: #{duration_predictor_forward.2} parent=0 // loop_pre_header
    _
  $region3: #{duration_predictor_forward.2} parent=0 // loop_header
    %s18 = sphi 0, %s22
    %p19 = scmp.ge.s32.totalorder %s18, 4
    %s25 = sphi 0, %s37
    %s26 = sphi 0, %s33
    %s27 = sphi 0, %s25
    %s28 = sphi 0, %s26
    %s29 = sphi 0, %s27
    %s30 = sphi 0, %s28
    %s42 = sphi 0, %s44
    %s45 = sphi 0, %s42
    %s46 = sphi 0, %s45
    %s62 = sphi 0, %s46
    %s66 = sphi 0, %s66
    %s68 = sphi 0, %s66
    %s69 = sphi 0, %s68
    %s83 = sphi 0, %s69
    %s87 = sphi 0, %s87
    %s89 = sphi 0, %s87
    %s90 = sphi 0, %s89
    %s104 = sphi 0, %s90
    %s112 = sphi 0, %s114
    %s115 = sphi 0, %s112
    %s116 = sphi 0, %s115
    %s132 = sphi 0, %s116
  $region4: #{duration_predictor_forward.2} parent=0 // loop_header_branch
    %21 = sbr.rel (%p19) target = $region8
  $region5: #{duration_predictor_forward.2} parent=0 // loop_body
    %s23 = ssub.s32 %s18, 1
    %s24 = ssub.s32 %s18, 2
    %s31 = sadd.s32 1, %s26
    %p32 = scmp.ge.s32.totalorder %s31, 2
    %s33 = scalar_select %p32, 0, %s31
    %s34 = sadd.s32 1, %s25
    %s35 = scalar_select %p32, %s34, %s25
    %p36 = scmp.ge.s32.totalorder %s35, 1
    %s37 = scalar_select %p36, 0, %s35
    %s38 = ssub.s32 %s26, %s33
    %s39 = ssub.s32 %s25, %s37
    %s40 = sor.u32 %s38, %s39
    %p41 = scmp.eq.s32.totalorder %s40, 0
    %s43 = sadd.s32 %s42, 1
    %s44 = scalar_select %p41, %s42, %s43
    %p47 = pneg %p41
    %p48 = scmp.eq.s32.totalorder %s18, 1
    %p49 = por %p47, %p48
    %p50 = scmp.ne.s32.totalorder %s42, %s45
    %p51 = scmp.eq.s32.totalorder %s18, 0
    %p52 = por %p50, %p51
    %p53 = scmp.ne.s32.totalorder %s42, %s45
    %p54 = scmp.eq.s32.totalorder %s23, 1
    %p55 = por %p53, %p54
    %p56 = scmp.ne.s32.totalorder %s45, %s46
    %p57 = scmp.eq.s32.totalorder %s23, 0
    %p58 = por %p56, %p57
    %p59 = scmp.ne.s32.totalorder %s45, %s46
    %p60 = scmp.eq.s32.totalorder %s24, 1
    %p61 = por %p59, %p60
    %p63 = scmp.ne.s32.totalorder %s46, %s62
    %p64 = scmp.eq.s32.totalorder %s24, 0
    %p65 = por %p63, %p64
    %s67 = sadd.s32 %s66, 1
    %p70 = scmp.eq.s32.totalorder %s18, 1
    %p71 = scmp.ne.s32.totalorder %s66, %s68
    %p72 = scmp.eq.s32.totalorder %s18, 0
    %p73 = por %p71, %p72
    %p74 = scmp.ne.s32.totalorder %s66, %s68
    %p75 = scmp.eq.s32.totalorder %s23, 1
    %p76 = por %p74, %p75
    %p77 = scmp.ne.s32.totalorder %s68, %s69
    %p78 = scmp.eq.s32.totalorder %s23, 0
    %p79 = por %p77, %p78
    %p80 = scmp.ne.s32.totalorder %s68, %s69
    %p81 = scmp.eq.s32.totalorder %s24, 1
    %p82 = por %p80, %p81
    %p84 = scmp.ne.s32.totalorder %s69, %s83
    %p85 = scmp.eq.s32.totalorder %s24, 0
    %p86 = por %p84, %p85
    %s88 = sadd.s32 %s87, 1
    %p91 = scmp.eq.s32.totalorder %s18, 1
    %p92 = scmp.ne.s32.totalorder %s87, %s89
    %p93 = scmp.eq.s32.totalorder %s18, 0
    %p94 = por %p92, %p93
    %p95 = scmp.ne.s32.totalorder %s87, %s89
    %p96 = scmp.eq.s32.totalorder %s23, 1
    %p97 = por %p95, %p96
    %p98 = scmp.ne.s32.totalorder %s89, %s90
    %p99 = scmp.eq.s32.totalorder %s23, 0
    %p100 = por %p98, %p99
    %p101 = scmp.ne.s32.totalorder %s89, %s90
    %p102 = scmp.eq.s32.totalorder %s24, 1
    %p103 = por %p101, %p102
    %p105 = scmp.ne.s32.totalorder %s90, %s104
    %p106 = scmp.eq.s32.totalorder %s24, 0
    %p107 = por %p105, %p106
    %s108 = ssub.s32 %s26, %s33
    %s109 = ssub.s32 %s25, %s37
    %s110 = sor.u32 %s108, %s109
    %p111 = scmp.eq.s32.totalorder %s110, 0
    %s113 = sadd.s32 %s112, 1
    %s114 = scalar_select %p111, %s112, %s113
    %p117 = pneg %p111
    %p118 = scmp.eq.s32.totalorder %s18, 1
    %p119 = por %p117, %p118
    %p120 = scmp.ne.s32.totalorder %s112, %s115
    %p121 = scmp.eq.s32.totalorder %s18, 0
    %p122 = por %p120, %p121
    %p123 = scmp.ne.s32.totalorder %s112, %s115
    %p124 = scmp.eq.s32.totalorder %s23, 1
    %p125 = por %p123, %p124
    %p126 = scmp.ne.s32.totalorder %s115, %s116
    %p127 = scmp.eq.s32.totalorder %s23, 0
    %p128 = por %p126, %p127
    %p129 = scmp.ne.s32.totalorder %s115, %s116
    %p130 = scmp.eq.s32.totalorder %s24, 1
    %p131 = por %p129, %p130
    %p133 = scmp.ne.s32.totalorder %s116, %s132
    %p134 = scmp.eq.s32.totalorder %s24, 0
    %p135 = por %p133, %p134
    %p136 = scmp.le.s32.totalorder 1, %s18
    %p137 = scmp.lt.s32.totalorder %s18, 3
    %p138 = pnand %p136, %p137
    %p139 = pneg %p138
    // Predicated region
    $region9: #{duration_predictor_forward.2} parent=5 // pred_check
      _
    $region10: #{duration_predictor_forward.2} parent=5 // pred_check_branch
      %141 = sbr.rel (%p138) target = $region12
    $region11: #{duration_predictor_forward.2} parent=5 // pred_region
      %s142 = ssub.s32 %s18, 1
      // Predicated region
      $region13: #{duration_predictor_forward.2} parent=11 // pred_check
        %p143 = pneg %p79
      $region14: #{duration_predictor_forward.2} parent=11 // pred_check_branch
        %145 = sbr.rel (%p143) target = $region16
      $region15: #{duration_predictor_forward.2} parent=11 // pred_region
        _
      $region16: #{duration_predictor_forward.2} parent=11 // pred_fallthru
        _
      // Predicated region
      $region17: #{duration_predictor_forward.2} parent=11 // pred_check
        %p146 = pneg %p100
      $region18: #{duration_predictor_forward.2} parent=11 // pred_check_branch
        %148 = sbr.rel (%p146) target = $region20
      $region19: #{duration_predictor_forward.2} parent=11 // pred_region
        _
      $region20: #{duration_predictor_forward.2} parent=11 // pred_fallthru
        _
    $region12: #{duration_predictor_forward.2} parent=5 // pred_fallthru
      _
    %p149 = scmp.lt.s32.totalorder %s18, 2
    // Predicated region
    $region21: #{duration_predictor_forward.2} parent=5 // pred_check
      %p150 = pneg %p149
    $region22: #{duration_predictor_forward.2} parent=5 // pred_check_branch
      %152 = sbr.rel (%p150) target = $region24
    $region23: #{duration_predictor_forward.2} parent=5 // pred_region
      // Predicated region
      $region25: #{duration_predictor_forward.2} parent=23 // pred_check
        %p153 = pneg %p52
      $region26: #{duration_predictor_forward.2} parent=23 // pred_check_branch
        %155 = sbr.rel (%p153) target = $region28
      $region27: #{duration_predictor_forward.2} parent=23 // pred_region
        %p156 = scmp.lt.s32.totalorder %s26, 1
        %s157 = scalar_select %p156, %s26, 1
        %p158 = scmp.lt.s32.totalorder %s25, 0
        %s159 = scalar_select %p158, %s25, 0
        %s160 = sadd.s32 %s159, %s157
        %s161 = smul.addr %s160, 4
        %s162 = scalar_lea.vmem %s1, %s161
      $region28: #{duration_predictor_forward.2} parent=23 // pred_fallthru
        _
    $region24: #{duration_predictor_forward.2} parent=5 // pred_fallthru
      _
    %p163 = scmp.le.s32.totalorder 1, %s18
    %p164 = scmp.lt.s32.totalorder %s18, 3
    %p165 = pnand %p163, %p164
    %p166 = pneg %p165
    // Predicated region
    $region29: #{duration_predictor_forward.2} parent=5 // pred_check
      _
    $region30: #{duration_predictor_forward.2} parent=5 // pred_check_branch
      %168 = sbr.rel (%p165) target = $region32
    $region31: #{duration_predictor_forward.2} parent=5 // pred_region
      %s169 = ssub.s32 %s18, 1
      %p170 = scmp.lt.s32.totalorder %s28, 1
      %s171 = scalar_select %p170, %s28, 1
      %p172 = scmp.lt.s32.totalorder %s27, 0
      %s173 = scalar_select %p172, %s27, 0
      %s174 = sadd.s32 %s173, %s171
      %s175 = smul.addr %s174, 4
      %s176 = scalar_lea.vmem %s1, %s175
      %p177 = pneg %p58
      %p178 = pneg %p55
      %p179 = pneg %p79
      %p180 = pneg %p76
      %p181 = pneg %p100
      %p182 = pneg %p97
      %p183 = pneg %p128
      %p184 = pneg %p125
      %p185 = scmp.lt.s32.totalorder %s28, 1
      %s186 = scalar_select %p185, %s28, 1
      %p187 = scmp.lt.s32.totalorder %s27, 0
      %s188 = scalar_select %p187, %s27, 0
      %s189 = smul.addr %s186, 4
      %s190 = sadd.s32 %s188, %s189
      %s191 = smul.addr %s190, 8
      %s192 = scalar_lea.vmem %s4, %s191
      %p193 = scmp.lt.s32.totalorder %s28, 1
      %s194 = scalar_select %p193, %s28, 1
      %p195 = scmp.lt.s32.totalorder %s27, 0
      %s196 = scalar_select %p195, %s27, 0
      %s197 = sadd.s32 %s196, %s194
      %s198 = smul.addr %s197, 4
      %s199 = scalar_lea.vmem %s1, %s198
      %p200 = scmp.lt.s32.totalorder %s28, 1
      %s201 = scalar_select %p200, %s28, 1
      %p202 = scmp.lt.s32.totalorder %s27, 0
      %s203 = scalar_select %p202, %s27, 0
      %s204 = smul.addr %s201, 4
      %s205 = sadd.s32 %s203, %s204
      %s206 = smul.addr %s205, 8
      %s207 = scalar_lea.vmem %s4, %s206
      %s208 = smul.u32 %s27, 128
      %s209 = sld [smem:[#allocation3 + %s28]]
      %v210 = vld [vmem:[%s199] sm:$0xf]
      %v211 = vld [vmem:[%s2] sm:$0xff]
      %v212 = vld [vmem:[%s2 + $0x8] sm:$0xff]
      %v213 = vld [vmem:[%s2 + $0x10] sm:$0xff]
      %v214 = vld [vmem:[%s2 + $0x18] sm:$0xff]
      %v215 = vld [vmem:[%s3] sm:$0xff]
      %v216 = vld [vmem:[%s3 + $0x8] sm:$0xff]
      %v217 = vld [vmem:[%s3 + $0x10] sm:$0xff]
      %v218 = vld [vmem:[%s3 + $0x18] sm:$0xff]
      %220 = vset.pattern.permute.xlu0 0
      %221 = vperm.xlu0 %220, %v211
      %v222 = vpop.permute.xlu0 %221
      %225 = vset.pattern.permute.xlu0 0
      %226 = vperm.xlu0 %225, %v212
      %v227 = vpop.permute.xlu0 %226
      %230 = vset.pattern.permute.xlu0 0
      %231 = vperm.xlu0 %230, %v213
      %v232 = vpop.permute.xlu0 %231
      %235 = vset.pattern.permute.xlu0 0
      %236 = vperm.xlu0 %235, %v214
      %v237 = vpop.permute.xlu0 %236
      %v239 = vperm.slane %v210, 0
      %v240 = vmul.f32 %v222, %v239
      %v241 = vmul.f32 %v227, %v239
      %v242 = vmul.f32 %v232, %v239
      %v243 = vmul.f32 %v237, %v239
      %244 = vset.pattern.permute.xlu0 1
      %245 = vperm.xlu0 %244, %v211
      %v246 = vpop.permute.xlu0 %245
      %248 = vset.pattern.permute.xlu0 1
      %249 = vperm.xlu0 %248, %v212
      %v250 = vpop.permute.xlu0 %249
      %252 = vset.pattern.permute.xlu0 1
      %253 = vperm.xlu0 %252, %v213
      %v254 = vpop.permute.xlu0 %253
      %256 = vset.pattern.permute.xlu0 1
      %257 = vperm.xlu0 %256, %v214
      %v258 = vpop.permute.xlu0 %257
      %v260 = vperm.slane %v210, 1
      %v261 = vmul.f32 %v246, %v260
      %v262 = vmul.f32 %v250, %v260
      %v263 = vmul.f32 %v254, %v260
      %v264 = vmul.f32 %v258, %v260
      %v265 = vadd.f32 %v240, %v261
      %v266 = vadd.f32 %v241, %v262
      %v267 = vadd.f32 %v242, %v263
      %v268 = vadd.f32 %v243, %v264
      %269 = vset.pattern.permute.xlu0 2
      %270 = vperm.xlu0 %269, %v211
      %v271 = vpop.permute.xlu0 %270
      %273 = vset.pattern.permute.xlu0 2
      %274 = vperm.xlu0 %273, %v212
      %v275 = vpop.permute.xlu0 %274
      %277 = vset.pattern.permute.xlu0 2
      %278 = vperm.xlu0 %277, %v213
      %v279 = vpop.permute.xlu0 %278
      %281 = vset.pattern.permute.xlu0 2
      %282 = vperm.xlu0 %281, %v214
      %v283 = vpop.permute.xlu0 %282
      %v285 = vperm.slane %v210, 2
      %v286 = vmul.f32 %v271, %v285
      %v287 = vmul.f32 %v275, %v285
      %v288 = vmul.f32 %v279, %v285
      %v289 = vmul.f32 %v283, %v285
      %v290 = vadd.f32 %v265, %v286
      %v291 = vadd.f32 %v266, %v287
      %v292 = vadd.f32 %v267, %v288
      %v293 = vadd.f32 %v268, %v289
      %294 = vset.pattern.permute.xlu0 3
      %295 = vperm.xlu0 %294, %v211
      %v296 = vpop.permute.xlu0 %295
      %298 = vset.pattern.permute.xlu0 3
      %299 = vperm.xlu0 %298, %v212
      %v300 = vpop.permute.xlu0 %299
      %302 = vset.pattern.permute.xlu0 3
      %303 = vperm.xlu0 %302, %v213
      %v304 = vpop.permute.xlu0 %303
      %306 = vset.pattern.permute.xlu0 3
      %307 = vperm.xlu0 %306, %v214
      %v308 = vpop.permute.xlu0 %307
      %v310 = vperm.slane %v210, 3
      %v311 = vmul.f32 %v296, %v310
      %v312 = vmul.f32 %v300, %v310
      %v313 = vmul.f32 %v304, %v310
      %v314 = vmul.f32 %v308, %v310
      %v315 = vadd.f32 %v290, %v311
      %v316 = vadd.f32 %v291, %v312
      %v317 = vadd.f32 %v292, %v313
      %v318 = vadd.f32 %v293, %v314
      %320 = vset.pattern.permute.xlu0 0
      %321 = vperm.xlu0 %320, %v215
      %v322 = vpop.permute.xlu0 %321
      %325 = vset.pattern.permute.xlu0 0
      %326 = vperm.xlu0 %325, %v216
      %v327 = vpop.permute.xlu0 %326
      %330 = vset.pattern.permute.xlu0 0
      %331 = vperm.xlu0 %330, %v217
      %v332 = vpop.permute.xlu0 %331
      %335 = vset.pattern.permute.xlu0 0
      %336 = vperm.xlu0 %335, %v218
      %v337 = vpop.permute.xlu0 %336
      %v339 = vadd.f32 %v315, %v322
      %v340 = vadd.f32 %v316, %v327
      %v341 = vadd.f32 %v317, %v332
      %v342 = vadd.f32 %v318, %v337
      %v343 = vlaneseq
      %v344 = vand.u32 %v343, 127
      %v345 = vstv %s208
      %v346 = vadd.s32 %v345, %v344
      %v347 = vstv %s209
      %vm348 = vcmp.lt.s32.totalorder %v346, %v347
      %v349 = vsel %vm348, 1, 0
      %vm350 = vcmp.eq.s32.totalorder %v349, 1
      %v351 = vsel %vm350, %v339, 0.0
      %v352 = vsel %vm350, %v340, 0.0
      %v353 = vsel %vm350, %v341, 0.0
      %v354 = vsel %vm350, %v342, 0.0
      %355 = vst [vmem:[%s207] sm:$0xff] %v351
      %356 = vst [vmem:[%s207 + $0x8] sm:$0xff] %v352
      %357 = vst [vmem:[%s207 + $0x10] sm:$0xff] %v353
      %358 = vst [vmem:[%s207 + $0x18] sm:$0xff] %v354
      %p359 = scmp.lt.s32.totalorder %s28, 1
      %s360 = scalar_select %p359, %s28, 1
      %p361 = scmp.lt.s32.totalorder %s27, 0
      %s362 = scalar_select %p361, %s27, 0
      %s363 = smul.addr %s360, 4
      %s364 = sadd.s32 %s362, %s363
      %s365 = smul.addr %s364, 8
      %s366 = scalar_lea.vmem %s4, %s365
      // Predicated region
      $region33: #{duration_predictor_forward.2} parent=31 // pred_check
        %p367 = pneg %p125
      $region34: #{duration_predictor_forward.2} parent=31 // pred_check_branch
        %369 = sbr.rel (%p367) target = $region36
      $region35: #{duration_predictor_forward.2} parent=31 // pred_region
        _
      $region36: #{duration_predictor_forward.2} parent=31 // pred_fallthru
        _
    $region32: #{duration_predictor_forward.2} parent=5 // pred_fallthru
      _
    %p370 = scmp.le.s32.totalorder 2, %s18
    // Predicated region
    $region37: #{duration_predictor_forward.2} parent=5 // pred_check
      %p371 = pneg %p370
    $region38: #{duration_predictor_forward.2} parent=5 // pred_check_branch
      %373 = sbr.rel (%p371) target = $region40
    $region39: #{duration_predictor_forward.2} parent=5 // pred_region
      %s374 = ssub.s32 %s18, 2
      // Predicated region
      $region41: #{duration_predictor_forward.2} parent=39 // pred_check
        %p375 = pneg %p131
      $region42: #{duration_predictor_forward.2} parent=39 // pred_check_branch
        %377 = sbr.rel (%p375) target = $region44
      $region43: #{duration_predictor_forward.2} parent=39 // pred_region
        %p378 = scmp.lt.s32.totalorder %s30, 1
        %s379 = scalar_select %p378, %s30, 1
        %p380 = scmp.lt.s32.totalorder %s29, 0
        %s381 = scalar_select %p380, %s29, 0
        %s382 = smul.addr %s379, 4
        %s383 = sadd.s32 %s381, %s382
        %s384 = smul.addr %s383, 8
        %s385 = scalar_lea.vmem %s4, %s384
      $region44: #{duration_predictor_forward.2} parent=39 // pred_fallthru
        _
    $region40: #{duration_predictor_forward.2} parent=5 // pred_fallthru
      _
  $region6: #{duration_predictor_forward.2} parent=0 // loop_footer
    %s22 = sadd.s32 1, %s18
  $region7: #{duration_predictor_forward.2} parent=0 // loop_footer_branch
    %17 = sbr.rel target = $region3
  $region8: #{duration_predictor_forward.2} parent=0 // loop_exit
    _

// kernel: duration_predictor_forward.3
$region0: #{duration_predictor_forward.3}
  #allocation0 [shape = 'u32[]', space=smem, size = 0x4, offset = 0x4, fixed_abs, tag = 'smem constant byte address 0x4 - core index']
  #allocation1 [shape = 'u32[72,128]{1,0:T(1,128)}', space=vmem, size = 0x9000, scoped, tag = 'internal scratch']
  #allocation2 [shape = 's32[1]{0}', space=sflag, size = 0x4, scoped, tag = 'scoped memory for duration_predictor_forward.3']
  #allocation3 [shape = 'u8[512]{0}', space=smem, size = 0x200, scoped, tag = 'prefetched SMEM operand 0']
  %s0 = inlined_call_operand.vmem [shape: s32[2], index: 0, kind: input, shape index: {}]
  %s1 = inlined_call_operand.vmem [shape: f32[2,8,128], index: 1, kind: input, shape index: {}]
  %s2 = inlined_call_operand.vmem [shape: f32[32,8], index: 2, kind: input, shape index: {}]
  %s3 = inlined_call_operand.vmem [shape: f32[32,1], index: 3, kind: input, shape index: {}]
  %s4 = inlined_call_operand.vmem [shape: f32[2,32,128], index: 4, kind: output, shape index: {}]
  %s5 = sld [smem:[#allocation0]]
  $region45: #{duration_predictor_forward.3} parent=0
    _
  %s7 = ssub.s32 1, %s5
  %s8 = scalar_select 0, %s7, %s5
  %s10 = sshll.u32 %s0, 4
  %s11 = int_to_ptr.vmem [resolvable:$true] %s10
  %13 = dma.vmem_to_smem %s11, 16, [#allocation3], [#allocation2]
  %15 = dma.done [#allocation2], 16
  %16 = sfence
  loop: start=0, step=1, limit=4
  $region2: #{duration_predictor_forward.3} parent=0 // loop_pre_header
    _
  $region3: #{duration_predictor_forward.3} parent=0 // loop_header
    %s18 = sphi 0, %s22
    %p19 = scmp.ge.s32.totalorder %s18, 4
    %s25 = sphi 0, %s37
    %s26 = sphi 0, %s33
    %s27 = sphi 0, %s25
    %s28 = sphi 0, %s26
    %s29 = sphi 0, %s27
    %s30 = sphi 0, %s28
    %s42 = sphi 0, %s44
    %s45 = sphi 0, %s42
    %s46 = sphi 0, %s45
    %s62 = sphi 0, %s46
    %s66 = sphi 0, %s66
    %s68 = sphi 0, %s66
    %s69 = sphi 0, %s68
    %s83 = sphi 0, %s69
    %s87 = sphi 0, %s87
    %s89 = sphi 0, %s87
    %s90 = sphi 0, %s89
    %s104 = sphi 0, %s90
    %s112 = sphi 0, %s114
    %s115 = sphi 0, %s112
    %s116 = sphi 0, %s115
    %s132 = sphi 0, %s116
  $region4: #{duration_predictor_forward.3} parent=0 // loop_header_branch
    %21 = sbr.rel (%p19) target = $region8
  $region5: #{duration_predictor_forward.3} parent=0 // loop_body
    %s23 = ssub.s32 %s18, 1
    %s24 = ssub.s32 %s18, 2
    %s31 = sadd.s32 1, %s26
    %p32 = scmp.ge.s32.totalorder %s31, 2
    %s33 = scalar_select %p32, 0, %s31
    %s34 = sadd.s32 1, %s25
    %s35 = scalar_select %p32, %s34, %s25
    %p36 = scmp.ge.s32.totalorder %s35, 1
    %s37 = scalar_select %p36, 0, %s35
    %s38 = ssub.s32 %s26, %s33
    %s39 = ssub.s32 %s25, %s37
    %s40 = sor.u32 %s38, %s39
    %p41 = scmp.eq.s32.totalorder %s40, 0
    %s43 = sadd.s32 %s42, 1
    %s44 = scalar_select %p41, %s42, %s43
    %p47 = pneg %p41
    %p48 = scmp.eq.s32.totalorder %s18, 1
    %p49 = por %p47, %p48
    %p50 = scmp.ne.s32.totalorder %s42, %s45
    %p51 = scmp.eq.s32.totalorder %s18, 0
    %p52 = por %p50, %p51
    %p53 = scmp.ne.s32.totalorder %s42, %s45
    %p54 = scmp.eq.s32.totalorder %s23, 1
    %p55 = por %p53, %p54
    %p56 = scmp.ne.s32.totalorder %s45, %s46
    %p57 = scmp.eq.s32.totalorder %s23, 0
    %p58 = por %p56, %p57
    %p59 = scmp.ne.s32.totalorder %s45, %s46
    %p60 = scmp.eq.s32.totalorder %s24, 1
    %p61 = por %p59, %p60
    %p63 = scmp.ne.s32.totalorder %s46, %s62
    %p64 = scmp.eq.s32.totalorder %s24, 0
    %p65 = por %p63, %p64
    %s67 = sadd.s32 %s66, 1
    %p70 = scmp.eq.s32.totalorder %s18, 1
    %p71 = scmp.ne.s32.totalorder %s66, %s68
    %p72 = scmp.eq.s32.totalorder %s18, 0
    %p73 = por %p71, %p72
    %p74 = scmp.ne.s32.totalorder %s66, %s68
    %p75 = scmp.eq.s32.totalorder %s23, 1
    %p76 = por %p74, %p75
    %p77 = scmp.ne.s32.totalorder %s68, %s69
    %p78 = scmp.eq.s32.totalorder %s23, 0
    %p79 = por %p77, %p78
    %p80 = scmp.ne.s32.totalorder %s68, %s69
    %p81 = scmp.eq.s32.totalorder %s24, 1
    %p82 = por %p80, %p81
    %p84 = scmp.ne.s32.totalorder %s69, %s83
    %p85 = scmp.eq.s32.totalorder %s24, 0
    %p86 = por %p84, %p85
    %s88 = sadd.s32 %s87, 1
    %p91 = scmp.eq.s32.totalorder %s18, 1
    %p92 = scmp.ne.s32.totalorder %s87, %s89
    %p93 = scmp.eq.s32.totalorder %s18, 0
    %p94 = por %p92, %p93
    %p95 = scmp.ne.s32.totalorder %s87, %s89
    %p96 = scmp.eq.s32.totalorder %s23, 1
    %p97 = por %p95, %p96
    %p98 = scmp.ne.s32.totalorder %s89, %s90
    %p99 = scmp.eq.s32.totalorder %s23, 0
    %p100 = por %p98, %p99
    %p101 = scmp.ne.s32.totalorder %s89, %s90
    %p102 = scmp.eq.s32.totalorder %s24, 1
    %p103 = por %p101, %p102
    %p105 = scmp.ne.s32.totalorder %s90, %s104
    %p106 = scmp.eq.s32.totalorder %s24, 0
    %p107 = por %p105, %p106
    %s108 = ssub.s32 %s26, %s33
    %s109 = ssub.s32 %s25, %s37
    %s110 = sor.u32 %s108, %s109
    %p111 = scmp.eq.s32.totalorder %s110, 0
    %s113 = sadd.s32 %s112, 1
    %s114 = scalar_select %p111, %s112, %s113
    %p117 = pneg %p111
    %p118 = scmp.eq.s32.totalorder %s18, 1
    %p119 = por %p117, %p118
    %p120 = scmp.ne.s32.totalorder %s112, %s115
    %p121 = scmp.eq.s32.totalorder %s18, 0
    %p122 = por %p120, %p121
    %p123 = scmp.ne.s32.totalorder %s112, %s115
    %p124 = scmp.eq.s32.totalorder %s23, 1
    %p125 = por %p123, %p124
    %p126 = scmp.ne.s32.totalorder %s115, %s116
    %p127 = scmp.eq.s32.totalorder %s23, 0
    %p128 = por %p126, %p127
    %p129 = scmp.ne.s32.totalorder %s115, %s116
    %p130 = scmp.eq.s32.totalorder %s24, 1
    %p131 = por %p129, %p130
    %p133 = scmp.ne.s32.totalorder %s116, %s132
    %p134 = scmp.eq.s32.totalorder %s24, 0
    %p135 = por %p133, %p134
    %p136 = scmp.le.s32.totalorder 1, %s18
    %p137 = scmp.lt.s32.totalorder %s18, 3
    %p138 = pnand %p136, %p137
    %p139 = pneg %p138
    // Predicated region
    $region9: #{duration_predictor_forward.3} parent=5 // pred_check
      _
    $region10: #{duration_predictor_forward.3} parent=5 // pred_check_branch
      %141 = sbr.rel (%p138) target = $region12
    $region11: #{duration_predictor_forward.3} parent=5 // pred_region
      %s142 = ssub.s32 %s18, 1
      // Predicated region
      $region13: #{duration_predictor_forward.3} parent=11 // pred_check
        %p143 = pneg %p79
      $region14: #{duration_predictor_forward.3} parent=11 // pred_check_branch
        %145 = sbr.rel (%p143) target = $region16
      $region15: #{duration_predictor_forward.3} parent=11 // pred_region
        _
      $region16: #{duration_predictor_forward.3} parent=11 // pred_fallthru
        _
      // Predicated region
      $region17: #{duration_predictor_forward.3} parent=11 // pred_check
        %p146 = pneg %p100
      $region18: #{duration_predictor_forward.3} parent=11 // pred_check_branch
        %148 = sbr.rel (%p146) target = $region20
      $region19: #{duration_predictor_forward.3} parent=11 // pred_region
        _
      $region20: #{duration_predictor_forward.3} parent=11 // pred_fallthru
        _
    $region12: #{duration_predictor_forward.3} parent=5 // pred_fallthru
      _
    %p149 = scmp.lt.s32.totalorder %s18, 2
    // Predicated region
    $region21: #{duration_predictor_forward.3} parent=5 // pred_check
      %p150 = pneg %p149
    $region22: #{duration_predictor_forward.3} parent=5 // pred_check_branch
      %152 = sbr.rel (%p150) target = $region24
    $region23: #{duration_predictor_forward.3} parent=5 // pred_region
      // Predicated region
      $region25: #{duration_predictor_forward.3} parent=23 // pred_check
        %p153 = pneg %p52
      $region26: #{duration_predictor_forward.3} parent=23 // pred_check_branch
        %155 = sbr.rel (%p153) target = $region28
      $region27: #{duration_predictor_forward.3} parent=23 // pred_region
        %p156 = scmp.lt.s32.totalorder %s26, 1
        %s157 = scalar_select %p156, %s26, 1
        %p158 = scmp.lt.s32.totalorder %s25, 0
        %s159 = scalar_select %p158, %s25, 0
        %s160 = sadd.s32 %s159, %s157
        %s161 = smul.addr %s160, 8
        %s162 = scalar_lea.vmem %s1, %s161
      $region28: #{duration_predictor_forward.3} parent=23 // pred_fallthru
        _
    $region24: #{duration_predictor_forward.3} parent=5 // pred_fallthru
      _
    %p163 = scmp.le.s32.totalorder 1, %s18
    %p164 = scmp.lt.s32.totalorder %s18, 3
    %p165 = pnand %p163, %p164
    %p166 = pneg %p165
    // Predicated region
    $region29: #{duration_predictor_forward.3} parent=5 // pred_check
      _
    $region30: #{duration_predictor_forward.3} parent=5 // pred_check_branch
      %168 = sbr.rel (%p165) target = $region32
    $region31: #{duration_predictor_forward.3} parent=5 // pred_region
      %s169 = ssub.s32 %s18, 1
      %p170 = scmp.lt.s32.totalorder %s28, 1
      %s171 = scalar_select %p170, %s28, 1
      %p172 = scmp.lt.s32.totalorder %s27, 0
      %s173 = scalar_select %p172, %s27, 0
      %s174 = sadd.s32 %s173, %s171
      %s175 = smul.addr %s174, 8
      %s176 = scalar_lea.vmem %s1, %s175
      %p177 = pneg %p58
      %p178 = pneg %p55
      %p179 = pneg %p79
      %p180 = pneg %p76
      %p181 = pneg %p100
      %p182 = pneg %p97
      %p183 = pneg %p128
      %p184 = pneg %p125
      %p185 = scmp.lt.s32.totalorder %s28, 1
      %s186 = scalar_select %p185, %s28, 1
      %p187 = scmp.lt.s32.totalorder %s27, 0
      %s188 = scalar_select %p187, %s27, 0
      %s189 = smul.addr %s186, 4
      %s190 = sadd.s32 %s188, %s189
      %s191 = smul.addr %s190, 8
      %s192 = scalar_lea.vmem %s4, %s191
      %p193 = scmp.lt.s32.totalorder %s28, 1
      %s194 = scalar_select %p193, %s28, 1
      %p195 = scmp.lt.s32.totalorder %s27, 0
      %s196 = scalar_select %p195, %s27, 0
      %s197 = sadd.s32 %s196, %s194
      %s198 = smul.addr %s197, 8
      %s199 = scalar_lea.vmem %s1, %s198
      %p200 = scmp.lt.s32.totalorder %s28, 1
      %s201 = scalar_select %p200, %s28, 1
      %p202 = scmp.lt.s32.totalorder %s27, 0
      %s203 = scalar_select %p202, %s27, 0
      %s204 = smul.addr %s201, 4
      %s205 = sadd.s32 %s203, %s204
      %s206 = smul.addr %s205, 8
      %s207 = scalar_lea.vmem %s4, %s206
      %s208 = smul.u32 %s27, 128
      %s209 = sld [smem:[#allocation3 + %s28]]
      %v210 = vld [vmem:[%s199] sm:$0xff]
      %v211 = vld [vmem:[%s2] sm:$0xff]
      %v212 = vld [vmem:[%s2 + $0x8] sm:$0xff]
      %v213 = vld [vmem:[%s2 + $0x10] sm:$0xff]
      %v214 = vld [vmem:[%s2 + $0x18] sm:$0xff]
      %v215 = vld [vmem:[%s3] sm:$0xff]
      %v216 = vld [vmem:[%s3 + $0x8] sm:$0xff]
      %v217 = vld [vmem:[%s3 + $0x10] sm:$0xff]
      %v218 = vld [vmem:[%s3 + $0x18] sm:$0xff]
      %220 = vset.pattern.permute.xlu0 0
      %221 = vperm.xlu0 %220, %v211
      %v222 = vpop.permute.xlu0 %221
      %225 = vset.pattern.permute.xlu0 0
      %226 = vperm.xlu0 %225, %v212
      %v227 = vpop.permute.xlu0 %226
      %230 = vset.pattern.permute.xlu0 0
      %231 = vperm.xlu0 %230, %v213
      %v232 = vpop.permute.xlu0 %231
      %235 = vset.pattern.permute.xlu0 0
      %236 = vperm.xlu0 %235, %v214
      %v237 = vpop.permute.xlu0 %236
      %v239 = vperm.slane %v210, 0
      %v240 = vmul.f32 %v222, %v239
      %v241 = vmul.f32 %v227, %v239
      %v242 = vmul.f32 %v232, %v239
      %v243 = vmul.f32 %v237, %v239
      %244 = vset.pattern.permute.xlu0 1
      %245 = vperm.xlu0 %244, %v211
      %v246 = vpop.permute.xlu0 %245
      %248 = vset.pattern.permute.xlu0 1
      %249 = vperm.xlu0 %248, %v212
      %v250 = vpop.permute.xlu0 %249
      %252 = vset.pattern.permute.xlu0 1
      %253 = vperm.xlu0 %252, %v213
      %v254 = vpop.permute.xlu0 %253
      %256 = vset.pattern.permute.xlu0 1
      %257 = vperm.xlu0 %256, %v214
      %v258 = vpop.permute.xlu0 %257
      %v260 = vperm.slane %v210, 1
      %v261 = vmul.f32 %v246, %v260
      %v262 = vmul.f32 %v250, %v260
      %v263 = vmul.f32 %v254, %v260
      %v264 = vmul.f32 %v258, %v260
      %v265 = vadd.f32 %v240, %v261
      %v266 = vadd.f32 %v241, %v262
      %v267 = vadd.f32 %v242, %v263
      %v268 = vadd.f32 %v243, %v264
      %269 = vset.pattern.permute.xlu0 2
      %270 = vperm.xlu0 %269, %v211
      %v271 = vpop.permute.xlu0 %270
      %273 = vset.pattern.permute.xlu0 2
      %274 = vperm.xlu0 %273, %v212
      %v275 = vpop.permute.xlu0 %274
      %277 = vset.pattern.permute.xlu0 2
      %278 = vperm.xlu0 %277, %v213
      %v279 = vpop.permute.xlu0 %278
      %281 = vset.pattern.permute.xlu0 2
      %282 = vperm.xlu0 %281, %v214
      %v283 = vpop.permute.xlu0 %282
      %v285 = vperm.slane %v210, 2
      %v286 = vmul.f32 %v271, %v285
      %v287 = vmul.f32 %v275, %v285
      %v288 = vmul.f32 %v279, %v285
      %v289 = vmul.f32 %v283, %v285
      %v290 = vadd.f32 %v265, %v286
      %v291 = vadd.f32 %v266, %v287
      %v292 = vadd.f32 %v267, %v288
      %v293 = vadd.f32 %v268, %v289
      %294 = vset.pattern.permute.xlu0 3
      %295 = vperm.xlu0 %294, %v211
      %v296 = vpop.permute.xlu0 %295
      %298 = vset.pattern.permute.xlu0 3
      %299 = vperm.xlu0 %298, %v212
      %v300 = vpop.permute.xlu0 %299
      %302 = vset.pattern.permute.xlu0 3
      %303 = vperm.xlu0 %302, %v213
      %v304 = vpop.permute.xlu0 %303
      %306 = vset.pattern.permute.xlu0 3
      %307 = vperm.xlu0 %306, %v214
      %v308 = vpop.permute.xlu0 %307
      %v310 = vperm.slane %v210, 3
      %v311 = vmul.f32 %v296, %v310
      %v312 = vmul.f32 %v300, %v310
      %v313 = vmul.f32 %v304, %v310
      %v314 = vmul.f32 %v308, %v310
      %v315 = vadd.f32 %v290, %v311
      %v316 = vadd.f32 %v291, %v312
      %v317 = vadd.f32 %v292, %v313
      %v318 = vadd.f32 %v293, %v314
      %319 = vset.pattern.permute.xlu0 4
      %320 = vperm.xlu0 %319, %v211
      %v321 = vpop.permute.xlu0 %320
      %323 = vset.pattern.permute.xlu0 4
      %324 = vperm.xlu0 %323, %v212
      %v325 = vpop.permute.xlu0 %324
      %327 = vset.pattern.permute.xlu0 4
      %328 = vperm.xlu0 %327, %v213
      %v329 = vpop.permute.xlu0 %328
      %331 = vset.pattern.permute.xlu0 4
      %332 = vperm.xlu0 %331, %v214
      %v333 = vpop.permute.xlu0 %332
      %v335 = vperm.slane %v210, 4
      %v336 = vmul.f32 %v321, %v335
      %v337 = vmul.f32 %v325, %v335
      %v338 = vmul.f32 %v329, %v335
      %v339 = vmul.f32 %v333, %v335
      %v340 = vadd.f32 %v315, %v336
      %v341 = vadd.f32 %v316, %v337
      %v342 = vadd.f32 %v317, %v338
      %v343 = vadd.f32 %v318, %v339
      %344 = vset.pattern.permute.xlu0 5
      %345 = vperm.xlu0 %344, %v211
      %v346 = vpop.permute.xlu0 %345
      %348 = vset.pattern.permute.xlu0 5
      %349 = vperm.xlu0 %348, %v212
      %v350 = vpop.permute.xlu0 %349
      %352 = vset.pattern.permute.xlu0 5
      %353 = vperm.xlu0 %352, %v213
      %v354 = vpop.permute.xlu0 %353
      %356 = vset.pattern.permute.xlu0 5
      %357 = vperm.xlu0 %356, %v214
      %v358 = vpop.permute.xlu0 %357
      %v360 = vperm.slane %v210, 5
      %v361 = vmul.f32 %v346, %v360
      %v362 = vmul.f32 %v350, %v360
      %v363 = vmul.f32 %v354, %v360
      %v364 = vmul.f32 %v358, %v360
      %v365 = vadd.f32 %v340, %v361
      %v366 = vadd.f32 %v341, %v362
      %v367 = vadd.f32 %v342, %v363
      %v368 = vadd.f32 %v343, %v364
      %369 = vset.pattern.permute.xlu0 6
      %370 = vperm.xlu0 %369, %v211
      %v371 = vpop.permute.xlu0 %370
      %373 = vset.pattern.permute.xlu0 6
      %374 = vperm.xlu0 %373, %v212
      %v375 = vpop.permute.xlu0 %374
      %377 = vset.pattern.permute.xlu0 6
      %378 = vperm.xlu0 %377, %v213
      %v379 = vpop.permute.xlu0 %378
      %381 = vset.pattern.permute.xlu0 6
      %382 = vperm.xlu0 %381, %v214
      %v383 = vpop.permute.xlu0 %382
      %v385 = vperm.slane %v210, 6
      %v386 = vmul.f32 %v371, %v385
      %v387 = vmul.f32 %v375, %v385
      %v388 = vmul.f32 %v379, %v385
      %v389 = vmul.f32 %v383, %v385
      %v390 = vadd.f32 %v365, %v386
      %v391 = vadd.f32 %v366, %v387
      %v392 = vadd.f32 %v367, %v388
      %v393 = vadd.f32 %v368, %v389
      %394 = vset.pattern.permute.xlu0 7
      %395 = vperm.xlu0 %394, %v211
      %v396 = vpop.permute.xlu0 %395
      %398 = vset.pattern.permute.xlu0 7
      %399 = vperm.xlu0 %398, %v212
      %v400 = vpop.permute.xlu0 %399
      %402 = vset.pattern.permute.xlu0 7
      %403 = vperm.xlu0 %402, %v213
      %v404 = vpop.permute.xlu0 %403
      %406 = vset.pattern.permute.xlu0 7
      %407 = vperm.xlu0 %406, %v214
      %v408 = vpop.permute.xlu0 %407
      %v410 = vperm.slane %v210, 7
      %v411 = vmul.f32 %v396, %v410
      %v412 = vmul.f32 %v400, %v410
      %v413 = vmul.f32 %v404, %v410
      %v414 = vmul.f32 %v408, %v410
      %v415 = vadd.f32 %v390, %v411
      %v416 = vadd.f32 %v391, %v412
      %v417 = vadd.f32 %v392, %v413
      %v418 = vadd.f32 %v393, %v414
      %420 = vset.pattern.permute.xlu0 0
      %421 = vperm.xlu0 %420, %v215
      %v422 = vpop.permute.xlu0 %421
      %425 = vset.pattern.permute.xlu0 0
      %426 = vperm.xlu0 %425, %v216
      %v427 = vpop.permute.xlu0 %426
      %430 = vset.pattern.permute.xlu0 0
      %431 = vperm.xlu0 %430, %v217
      %v432 = vpop.permute.xlu0 %431
      %435 = vset.pattern.permute.xlu0 0
      %436 = vperm.xlu0 %435, %v218
      %v437 = vpop.permute.xlu0 %436
      %v439 = vadd.f32 %v415, %v422
      %v440 = vadd.f32 %v416, %v427
      %v441 = vadd.f32 %v417, %v432
      %v442 = vadd.f32 %v418, %v437
      %v443 = vlaneseq
      %v444 = vand.u32 %v443, 127
      %v445 = vstv %s208
      %v446 = vadd.s32 %v445, %v444
      %v447 = vstv %s209
      %vm448 = vcmp.lt.s32.totalorder %v446, %v447
      %v449 = vsel %vm448, 1, 0
      %vm450 = vcmp.eq.s32.totalorder %v449, 1
      %v451 = vsel %vm450, %v439, 0.0
      %v452 = vsel %vm450, %v440, 0.0
      %v453 = vsel %vm450, %v441, 0.0
      %v454 = vsel %vm450, %v442, 0.0
      %455 = vst [vmem:[%s207] sm:$0xff] %v451
      %456 = vst [vmem:[%s207 + $0x8] sm:$0xff] %v452
      %457 = vst [vmem:[%s207 + $0x10] sm:$0xff] %v453
      %458 = vst [vmem:[%s207 + $0x18] sm:$0xff] %v454
      %p459 = scmp.lt.s32.totalorder %s28, 1
      %s460 = scalar_select %p459, %s28, 1
      %p461 = scmp.lt.s32.totalorder %s27, 0
      %s462 = scalar_select %p461, %s27, 0
      %s463 = smul.addr %s460, 4
      %s464 = sadd.s32 %s462, %s463
      %s465 = smul.addr %s464, 8
      %s466 = scalar_lea.vmem %s4, %s465
      // Predicated region
      $region33: #{duration_predictor_forward.3} parent=31 // pred_check
        %p467 = pneg %p125
      $region34: #{duration_predictor_forward.3} parent=31 // pred_check_branch
        %469 = sbr.rel (%p467) target = $region36
      $region35: #{duration_predictor_forward.3} parent=31 // pred_region
        _
      $region36: #{duration_predictor_forward.3} parent=31 // pred_fallthru
        _
    $region32: #{duration_predictor_forward.3} parent=5 // pred_fallthru
      _
    %p470 = scmp.le.s32.totalorder 2, %s18
    // Predicated region
    $region37: #{duration_predictor_forward.3} parent=5 // pred_check
      %p471 = pneg %p470
    $region38: #{duration_predictor_forward.3} parent=5 // pred_check_branch
      %473 = sbr.rel (%p471) target = $region40
    $region39: #{duration_predictor_forward.3} parent=5 // pred_region
      %s474 = ssub.s32 %s18, 2
      // Predicated region
      $region41: #{duration_predictor_forward.3} parent=39 // pred_check
        %p475 = pneg %p131
      $region42: #{duration_predictor_forward.3} parent=39 // pred_check_branch
        %477 = sbr.rel (%p475) target = $region44
      $region43: #{duration_predictor_forward.3} parent=39 // pred_region
        %p478 = scmp.lt.s32.totalorder %s30, 1
        %s479 = scalar_select %p478, %s30, 1
        %p480 = scmp.lt.s32.totalorder %s29, 0
        %s481 = scalar_select %p480, %s29, 0
        %s482 = smul.addr %s479, 4
        %s483 = sadd.s32 %s481, %s482
        %s484 = smul.addr %s483, 8
        %s485 = scalar_lea.vmem %s4, %s484
      $region44: #{duration_predictor_forward.3} parent=39 // pred_fallthru
        _
    $region40: #{duration_predictor_forward.3} parent=5 // pred_fallthru
      _
  $region6: #{duration_predictor_forward.3} parent=0 // loop_footer
    %s22 = sadd.s32 1, %s18
  $region7: #{duration_predictor_forward.3} parent=0 // loop_footer_branch
    %17 = sbr.rel target = $region3
  $region8: #{duration_predictor_forward.3} parent=0 // loop_exit
    _

</llo_original>
